<compile_context>
chip_gen: v7x
topology: tpu7x:2x2x1
jax: 0.10.0
libtpu: 0.0.40
codegen_flags: <defaults>
</compile_context>

<pallas_src>
import functools
import math

import jax
import jax.numpy as jnp
from jax.experimental import pallas as pl
from jax.experimental.pallas import tpu as pltpu

_LANE = 128
_SUBLANE = 8


def _round_up(n, m):
    return ((n + m - 1) // m) * m


def _apply_activation(y, activation):
    if activation == "Tanh":
        return jnp.tanh(y)
    if activation == "ReLU":
        return jnp.maximum(y, 0.0)
    if activation == "Sigmoid":
        return jax.nn.sigmoid(y)
    if activation == "None":
        return y
    raise ValueError(f"unsupported activation: {activation}")


def _fused_mlp_kernel(*refs, activations, compute_dtype):
    """One batch tile through the whole MLP; intermediates stay in VMEM/vregs."""
    x_ref = refs[0]
    o_ref = refs[-1]
    wb_refs = refs[1:-1]                      # (w0, b0, w1, b1, ...)

    h = x_ref[...]
    for l, act in enumerate(activations):
        w_ref = wb_refs[2 * l]
        b_ref = wb_refs[2 * l + 1]
        # MXU matmul with f32 accumulation; inputs in compute_dtype (f32 or bf16).
        y = jnp.dot(h.astype(compute_dtype), w_ref[...],
                    preferred_element_type=jnp.float32)
        y = y + b_ref[...]                    # (1, out) f32 bias broadcasts over batch
        # TODO(synk): nn.Dropout is identity in eval(); training-mode dropout would
        # need pltpu.prng_seed + pltpu.prng_random_bits + mask/scale here.
        h = _apply_activation(y, act)         # f32 VPU/EUP math
    o_ref[...] = h.astype(o_ref.dtype)


def init_mlp_params(key, net_config):
    """Deterministic PyTorch-style Linear init: U(-1/sqrt(fan_in), 1/sqrt(fan_in))."""
    params = []
    for cfg in net_config:
        fan_in, fan_out = cfg["in"], cfg["out"]
        key, kw, kb = jax.random.split(key, 3)
        bound = 1.0 / math.sqrt(fan_in)
        # PyTorch stores weight as (out, in); transpose to (in, out) for x @ W.
        w_torch = jax.random.uniform(kw, (fan_out, fan_in), jnp.float32, -bound, bound)
        b = jax.random.uniform(kb, (fan_out,), jnp.float32, -bound, bound)
        params.append({"w": jnp.transpose(w_torch), "b": b})
    return params


def pad_params(params, net_config, compute_dtype=jnp.float32):
    """Zero-pad every feature dim to a multiple of 128 (lane-dense), once."""
    padded = []
    for cfg, p in zip(net_config, params):
        din, dout = cfg["in"], cfg["out"]
        din_p, dout_p = _round_up(din, _LANE), _round_up(dout, _LANE)
        w = jnp.zeros((din_p, dout_p), jnp.float32).at[:din, :dout].set(p["w"])
        b = jnp.zeros((1, dout_p), jnp.float32).at[:, :dout].set(p["b"])
        padded.append({"w": w.astype(compute_dtype), "b": b})  # bias stays f32
    return padded


def mlp_forward(padded_params, net_config, x, *, compute_dtype=jnp.float32,
                tile_b=512, interpret=False):
    """Fused MLP forward. `padded_params` must come from pad_params(...)."""
    B, din = x.shape
    assert din == net_config[0]["in"]
    n_layers = len(net_config)
    dims = [net_config[0]["in"]] + [c["out"] for c in net_config]
    dims_p = [_round_up(d, _LANE) for d in dims]
    activations = tuple(c["activation"] for c in net_config)

    # Batch tile: multiple of 8 sublanes; small batches collapse to a single tile.
    tb = _round_up(min(tile_b, _round_up(B, _SUBLANE)), _SUBLANE)
    b_pad = _round_up(B, tb)
    grid = (b_pad // tb,)

    x_p = jnp.zeros((b_pad, dims_p[0]), compute_dtype).at[:B, :din].set(
        x.astype(compute_dtype))

    vmem = pltpu.MemorySpace.VMEM
    in_specs = [pl.BlockSpec((tb, dims_p[0]), lambda i: (i, 0), memory_space=vmem)]
    inputs = [x_p]
    for l, p in enumerate(padded_params):
        in_specs.append(pl.BlockSpec((dims_p[l], dims_p[l + 1]),
                                     lambda i: (0, 0), memory_space=vmem))
        in_specs.append(pl.BlockSpec((1, dims_p[l + 1]),
                                     lambda i: (0, 0), memory_space=vmem))
        inputs += [p["w"], p["b"]]
    out_specs = pl.BlockSpec((tb, dims_p[-1]), lambda i: (i, 0), memory_space=vmem)

    itemsize = jnp.dtype(compute_dtype).itemsize
    wb_bytes = sum(p["w"].size * itemsize + p["b"].size * 4 for p in padded_params)
    flops = 2 * b_pad * sum(dims_p[l] * dims_p[l + 1] for l in range(n_layers))
    transcendentals = b_pad * sum(
        dims_p[l + 1] for l, a in enumerate(activations) if a in ("Tanh", "Sigmoid"))
    bytes_accessed = x_p.size * itemsize + wb_bytes + b_pad * dims_p[-1] * 4

    # VMEM budget: double-buffered x/out tiles + resident weights + headroom.
    # (Stays far below v7x's 64 MiB/TC for any sane tile_b.)
    vmem_est = 2 * tb * (dims_p[0] * itemsize + dims_p[-1] * 4) + wb_bytes
    vmem_limit = int(min(96 * 1024 * 1024, max(8 * 1024 * 1024, 4 * vmem_est)))

    kernel = functools.partial(_fused_mlp_kernel, activations=activations,
                               compute_dtype=compute_dtype)
    out = pl.pallas_call(
        kernel,
        out_shape=jax.ShapeDtypeStruct((b_pad, dims_p[-1]), jnp.float32),
        grid=grid,
        in_specs=in_specs,
        out_specs=out_specs,
        compiler_params=pltpu.CompilerParams(
            dimension_semantics=("parallel",),
            vmem_limit_bytes=vmem_limit),
        cost_estimate=pl.CostEstimate(
            flops=int(flops),
            transcendentals=int(transcendentals),
            bytes_accessed=int(bytes_accessed)),
        interpret=interpret,
    )(*inputs)
    return out[:B, :dims[-1]]


def mlp_reference(params, net_config, x):
    """Pure-JAX reference (eval-mode dropout == identity)."""
    h = x
    for cfg, p in zip(net_config, params):
        h = h @ p["w"] + p["b"]
        h = _apply_activation(h, cfg["activation"])
    return h


if __name__ == "__main__":
    net_config = [
        {"in": 32, "out": 64, "drop_out": 0.1, "activation": "Tanh"},
        {"in": 64, "out": 32, "drop_out": 0.0, "activation": "Sigmoid"},
        {"in": 32, "out": 8, "drop_out": 0.0, "activation": "None"},
    ]

    key = jax.random.PRNGKey(0)
    key, kx, kx2 = jax.random.split(key, 3)
    params = init_mlp_params(key, net_config)

    # Case 1: small batch, single tile, f32 compute — strict check vs reference.
    batch = 8
    x = jax.random.normal(kx, (batch, net_config[0]["in"]), jnp.float32)
    padded_f32 = pad_params(params, net_config, compute_dtype=jnp.float32)
    out = jax.block_until_ready(mlp_forward(padded_f32, net_config, x))
    ref = mlp_reference(params, net_config, x)
    assert out.shape == (batch, net_config[-1]["out"])
    assert jnp.allclose(out, ref, atol=1e-5, rtol=1e-5), \
        float(jnp.max(jnp.abs(out - ref)))

    # Case 2: larger batch exercising the parallel batch grid + bf16 MXU inputs.
    batch2 = 256
    x2 = jax.random.normal(kx2, (batch2, net_config[0]["in"]), jnp.float32)
    padded_bf16 = pad_params(params, net_config, compute_dtype=jnp.bfloat16)
    out2 = jax.block_until_ready(
        mlp_forward(padded_bf16, net_config, x2,
                    compute_dtype=jnp.bfloat16, tile_b=64))
    ref2 = mlp_reference(params, net_config, x2)
    assert out2.shape == (batch2, net_config[-1]["out"])
    assert jnp.allclose(out2, ref2, atol=5e-2, rtol=5e-2), \
        float(jnp.max(jnp.abs(out2 - ref2)))

    print("KERNEL_OK")
</pallas_src>

<mosaic_0001>
module attributes {stable_mosaic.version = 11 : i64} {
  func.func @_fused_mlp_kernel(%arg0: i32, %arg1: memref<8x128xf32, #tpu.memory_space<vmem>>, %arg2: memref<128x128xf32, #tpu.memory_space<vmem>>, %arg3: memref<1x128xf32, #tpu.memory_space<vmem>>, %arg4: memref<128x128xf32, #tpu.memory_space<vmem>>, %arg5: memref<1x128xf32, #tpu.memory_space<vmem>>, %arg6: memref<128x128xf32, #tpu.memory_space<vmem>>, %arg7: memref<1x128xf32, #tpu.memory_space<vmem>>, %arg8: memref<8x128xf32, #tpu.memory_space<vmem>>) attributes {dimension_semantics = [#tpu.dimension_semantics<parallel>], iteration_bounds = array<i64: 1>, scalar_prefetch = 0 : i64, scratch_operands = 0 : i64, tpu.core_type = #tpu.core_type<tc>, window_params = [{transform_indices = @transform_0, window_bounds = array<i64: 8, 128>}, {pipeline_mode = #tpu.pipeline_mode<synchronous>, transform_indices = @transform_1, window_bounds = array<i64: 128, 128>}, {pipeline_mode = #tpu.pipeline_mode<synchronous>, transform_indices = @transform_2, window_bounds = array<i64: 1, 128>}, {pipeline_mode = #tpu.pipeline_mode<synchronous>, transform_indices = @transform_3, window_bounds = array<i64: 128, 128>}, {pipeline_mode = #tpu.pipeline_mode<synchronous>, transform_indices = @transform_4, window_bounds = array<i64: 1, 128>}, {pipeline_mode = #tpu.pipeline_mode<synchronous>, transform_indices = @transform_5, window_bounds = array<i64: 128, 128>}, {pipeline_mode = #tpu.pipeline_mode<synchronous>, transform_indices = @transform_6, window_bounds = array<i64: 1, 128>}, {transform_indices = @transform_7, window_bounds = array<i64: 8, 128>}]} {
    %c0 = arith.constant 0 : index
    %c0_0 = arith.constant 0 : index
    %0 = vector.load %arg1[%c0, %c0_0] : memref<8x128xf32, #tpu.memory_space<vmem>>, vector<8x128xf32>
    %c0_1 = arith.constant 0 : index
    %c0_2 = arith.constant 0 : index
    %1 = vector.load %arg2[%c0_1, %c0_2] : memref<128x128xf32, #tpu.memory_space<vmem>>, vector<128x128xf32>
    %cst = arith.constant dense<0.000000e+00> : vector<8x128xf32>
    %2 = tpu.matmul %0, %1, %cst {dimension_numbers = #tpu.dot_dimension_numbers<[1], [0], [0], [1], [0, 0, 1, 1], [], []>} : vector<8x128xf32>, vector<128x128xf32>, vector<8x128xf32> -> vector<8x128xf32>
    %c0_3 = arith.constant 0 : index
    %c0_4 = arith.constant 0 : index
    %3 = vector.load %arg3[%c0_3, %c0_4] : memref<1x128xf32, #tpu.memory_space<vmem>>, vector<1x128xf32>
    %4 = vector.broadcast %3 : vector<1x128xf32> to vector<8x128xf32>
    %5 = arith.addf %2, %4 : vector<8x128xf32>
    %6 = math.tanh %5 : vector<8x128xf32>
    %c0_5 = arith.constant 0 : index
    %c0_6 = arith.constant 0 : index
    %7 = vector.load %arg4[%c0_5, %c0_6] : memref<128x128xf32, #tpu.memory_space<vmem>>, vector<128x128xf32>
    %cst_7 = arith.constant dense<0.000000e+00> : vector<8x128xf32>
    %8 = tpu.matmul %6, %7, %cst_7 {dimension_numbers = #tpu.dot_dimension_numbers<[1], [0], [0], [1], [0, 0, 1, 1], [], []>} : vector<8x128xf32>, vector<128x128xf32>, vector<8x128xf32> -> vector<8x128xf32>
    %c0_8 = arith.constant 0 : index
    %c0_9 = arith.constant 0 : index
    %9 = vector.load %arg5[%c0_8, %c0_9] : memref<1x128xf32, #tpu.memory_space<vmem>>, vector<1x128xf32>
    %10 = vector.broadcast %9 : vector<1x128xf32> to vector<8x128xf32>
    %11 = arith.addf %8, %10 : vector<8x128xf32>
    %12 = arith.negf %11 : vector<8x128xf32>
    %13 = math.exp %12 : vector<8x128xf32>
    %cst_10 = arith.constant 1.000000e+00 : f32
    %14 = vector.broadcast %cst_10 : f32 to vector<8x128xf32>
    %15 = arith.addf %14, %13 : vector<8x128xf32>
    %16 = arith.divf %14, %15 : vector<8x128xf32>
    %c0_11 = arith.constant 0 : index
    %c0_12 = arith.constant 0 : index
    %17 = vector.load %arg6[%c0_11, %c0_12] : memref<128x128xf32, #tpu.memory_space<vmem>>, vector<128x128xf32>
    %cst_13 = arith.constant dense<0.000000e+00> : vector<8x128xf32>
    %18 = tpu.matmul %16, %17, %cst_13 {dimension_numbers = #tpu.dot_dimension_numbers<[1], [0], [0], [1], [0, 0, 1, 1], [], []>} : vector<8x128xf32>, vector<128x128xf32>, vector<8x128xf32> -> vector<8x128xf32>
    %c0_14 = arith.constant 0 : index
    %c0_15 = arith.constant 0 : index
    %19 = vector.load %arg7[%c0_14, %c0_15] : memref<1x128xf32, #tpu.memory_space<vmem>>, vector<1x128xf32>
    %20 = vector.broadcast %19 : vector<1x128xf32> to vector<8x128xf32>
    %21 = arith.addf %18, %20 : vector<8x128xf32>
    %c0_16 = arith.constant 0 : index
    %c0_17 = arith.constant 0 : index
    %22 = vector.load %arg8[%c0_16, %c0_17] : memref<8x128xf32, #tpu.memory_space<vmem>>, vector<8x128xf32>
    tpu.vector_store %arg8[%c0_16, %c0_17], %21 {strides = array<i32>} : memref<8x128xf32, #tpu.memory_space<vmem>>, vector<8x128xf32>,
    return
  }
  func.func @transform_0(%arg0: i32) -> (i32, i32) {
    %c0_i32 = arith.constant 0 : i32
    %c0_i32_0 = arith.constant 0 : i32
    return %arg0, %c0_i32 : i32, i32
  }
  func.func @transform_1(%arg0: i32) -> (i32, i32) {
    %c0_i32 = arith.constant 0 : i32
    %c0_i32_0 = arith.constant 0 : i32
    %c0_i32_1 = arith.constant 0 : i32
    return %c0_i32, %c0_i32_0 : i32, i32
  }
  func.func @transform_2(%arg0: i32) -> (i32, i32) {
    %c0_i32 = arith.constant 0 : i32
    %c0_i32_0 = arith.constant 0 : i32
    %c0_i32_1 = arith.constant 0 : i32
    return %c0_i32, %c0_i32_0 : i32, i32
  }
  func.func @transform_3(%arg0: i32) -> (i32, i32) {
    %c0_i32 = arith.constant 0 : i32
    %c0_i32_0 = arith.constant 0 : i32
    %c0_i32_1 = arith.constant 0 : i32
    return %c0_i32, %c0_i32_0 : i32, i32
  }
  func.func @transform_4(%arg0: i32) -> (i32, i32) {
    %c0_i32 = arith.constant 0 : i32
    %c0_i32_0 = arith.constant 0 : i32
    %c0_i32_1 = arith.constant 0 : i32
    return %c0_i32, %c0_i32_0 : i32, i32
  }
  func.func @transform_5(%arg0: i32) -> (i32, i32) {
    %c0_i32 = arith.constant 0 : i32
    %c0_i32_0 = arith.constant 0 : i32
    %c0_i32_1 = arith.constant 0 : i32
    return %c0_i32, %c0_i32_0 : i32, i32
  }
  func.func @transform_6(%arg0: i32) -> (i32, i32) {
    %c0_i32 = arith.constant 0 : i32
    %c0_i32_0 = arith.constant 0 : i32
    %c0_i32_1 = arith.constant 0 : i32
    return %c0_i32, %c0_i32_0 : i32, i32
  }
  func.func @transform_7(%arg0: i32) -> (i32, i32) {
    %c0_i32 = arith.constant 0 : i32
    %c0_i32_0 = arith.constant 0 : i32
    return %arg0, %c0_i32 : i32, i32
  }
}

</mosaic_0001>

<llo_original>
// kernel: tpu_custom_call.1
$region0: #{tpu_custom_call.1}
  #allocation0 [shape = 'u32[]', space=smem, size = 0x4, offset = 0x4, fixed_abs, tag = 'smem constant byte address 0x4 - core index']
  #allocation1 [shape = 'u32[144,128]{1,0:T(1,128)}', space=vmem, size = 0x12000, scoped, tag = 'internal scratch']
  %s0 = inlined_call_operand.hbm [shape: f32[8,128], index: 0, kind: input, shape index: {}]
  %s1 = inlined_call_operand.hbm [shape: f32[128,128], index: 1, kind: input, shape index: {}]
  %s2 = inlined_call_operand.vmem [shape: f32[1,128], index: 2, kind: input, shape index: {}]
  %s3 = inlined_call_operand.hbm [shape: f32[128,128], index: 3, kind: input, shape index: {}]
  %s4 = inlined_call_operand.vmem [shape: f32[1,128], index: 4, kind: input, shape index: {}]
  %s5 = inlined_call_operand.hbm [shape: f32[128,128], index: 5, kind: input, shape index: {}]
  %s6 = inlined_call_operand.vmem [shape: f32[1,128], index: 6, kind: input, shape index: {}]
  %s7 = inlined_call_operand.hbm [shape: f32[8,128], index: 7, kind: output, shape index: {}]
  %s8 = sld [smem:[#allocation0]]
  $region54: #{tpu_custom_call.1} parent=0
    _
  %s10 = ssub.s32 1, %s8
  %s11 = scalar_select 0, %s10, %s8
  $region1: #{tpu_custom_call.1} parent=0
    #allocation2 [shape = 'u8[4096]{0}', space=vmem, size = 0x1000, scoped, tag = 'input window, operand 0, single buffered']
    #allocation3 [shape = 's32[1]{0}', space=sflag, size = 0x4, scoped, tag = 'scoped memory for tpu_custom_call.1']
    #allocation4 [shape = 's32[1]{0}', space=sflag, size = 0x4, scoped, tag = 'scoped memory for tpu_custom_call.1']
    #allocation5 [shape = 'u8[65536]{0}', space=vmem, size = 0x10000, scoped, tag = 'input window, operand 1, single buffered']
    #allocation6 [shape = 's32[1]{0}', space=sflag, size = 0x4, scoped, tag = 'scoped memory for tpu_custom_call.1']
    #allocation7 [shape = 'u8[65536]{0}', space=vmem, size = 0x10000, scoped, tag = 'input window, operand 3, single buffered']
    #allocation8 [shape = 'u8[65536]{0}', space=vmem, size = 0x10000, scoped, tag = 'input window, operand 5, single buffered']
    #allocation9 [shape = 's32[1]{0}', space=sflag, size = 0x4, scoped, tag = 'scoped memory for tpu_custom_call.1']
    #allocation10 [shape = 'u8[4096]{0}', space=vmem, size = 0x1000, scoped, tag = 'output window, operand 0, single buffered']
    %12 = vsyncpa [#allocation3], 0
    %13 = vsyncpa [#allocation6], 0
    %14 = vsyncpa [#allocation9], 0
    %15 = vsyncpa [#allocation4], 0
    // Predicated region
    $region2: #{tpu_custom_call.1} parent=1 // pred_check
      _
    $region3: #{tpu_custom_call.1} parent=1 // pred_check_branch
      %17 = sbr.rel (0) target = $region5
    $region4: #{tpu_custom_call.1} parent=1 // pred_region
      %s19 = ssub.s32 128, 128
      %20 = vsyncadd [#allocation3], %s19
      %s22 = sshll.u32 [#allocation2], 4
      %s23 = int_to_ptr.vmem [resolvable:$true] %s22
      %25 = dma.hbm_to_vmem [thread:$0]  %s0, 128, %s23, [#allocation3]
    $region5: #{tpu_custom_call.1} parent=1 // pred_fallthru
      _
    // Predicated region
    $region6: #{tpu_custom_call.1} parent=1 // pred_check
      _
    $region7: #{tpu_custom_call.1} parent=1 // pred_check_branch
      %27 = sbr.rel (0) target = $region9
    $region8: #{tpu_custom_call.1} parent=1 // pred_region
      %s29 = ssub.s32 2048, 2048
      %30 = vsyncadd [#allocation6], %s29
      %s31 = sshll.u32 [#allocation5], 4
      %s32 = int_to_ptr.vmem [resolvable:$true] %s31
      %37 = dma.hbm_to_vmem [thread:$0]  %s1, 2048, %s32, [#allocation6], 128, 128, 8
    $region9: #{tpu_custom_call.1} parent=1 // pred_fallthru
      _
    // Predicated region
    $region10: #{tpu_custom_call.1} parent=1 // pred_check
      _
    $region11: #{tpu_custom_call.1} parent=1 // pred_check_branch
      %39 = sbr.rel (0) target = $region13
    $region12: #{tpu_custom_call.1} parent=1 // pred_region
      _
    $region13: #{tpu_custom_call.1} parent=1 // pred_fallthru
      _
    // Predicated region
    $region14: #{tpu_custom_call.1} parent=1 // pred_check
      _
    $region15: #{tpu_custom_call.1} parent=1 // pred_check_branch
      %41 = sbr.rel (0) target = $region17
    $region16: #{tpu_custom_call.1} parent=1 // pred_region
      %s43 = ssub.s32 2048, 2048
      %44 = vsyncadd [#allocation6], %s43
      %s45 = sshll.u32 [#allocation7], 4
      %s46 = int_to_ptr.vmem [resolvable:$true] %s45
      %51 = dma.hbm_to_vmem [thread:$0]  %s3, 2048, %s46, [#allocation6], 128, 128, 8
    $region17: #{tpu_custom_call.1} parent=1 // pred_fallthru
      _
    // Predicated region
    $region18: #{tpu_custom_call.1} parent=1 // pred_check
      _
    $region19: #{tpu_custom_call.1} parent=1 // pred_check_branch
      %53 = sbr.rel (0) target = $region21
    $region20: #{tpu_custom_call.1} parent=1 // pred_region
      _
    $region21: #{tpu_custom_call.1} parent=1 // pred_fallthru
      _
    // Predicated region
    $region22: #{tpu_custom_call.1} parent=1 // pred_check
      _
    $region23: #{tpu_custom_call.1} parent=1 // pred_check_branch
      %55 = sbr.rel (0) target = $region25
    $region24: #{tpu_custom_call.1} parent=1 // pred_region
      %s57 = ssub.s32 2048, 2048
      %58 = vsyncadd [#allocation9], %s57
      %s59 = sshll.u32 [#allocation8], 4
      %s60 = int_to_ptr.vmem [resolvable:$true] %s59
      %65 = dma.hbm_to_vmem [thread:$0]  %s5, 2048, %s60, [#allocation9], 128, 128, 8
    $region25: #{tpu_custom_call.1} parent=1 // pred_fallthru
      _
    // Predicated region
    $region26: #{tpu_custom_call.1} parent=1 // pred_check
      _
    $region27: #{tpu_custom_call.1} parent=1 // pred_check_branch
      %67 = sbr.rel (0) target = $region29
    $region28: #{tpu_custom_call.1} parent=1 // pred_region
      _
    $region29: #{tpu_custom_call.1} parent=1 // pred_fallthru
      _
    // Predicated region
    $region30: #{tpu_custom_call.1} parent=1 // pred_check
      _
    $region31: #{tpu_custom_call.1} parent=1 // pred_check_branch
      %69 = sbr.rel (0) target = $region33
    $region32: #{tpu_custom_call.1} parent=1 // pred_region
      %70 = dma.done [#allocation3], 128
    $region33: #{tpu_custom_call.1} parent=1 // pred_fallthru
      _
    // Predicated region
    $region34: #{tpu_custom_call.1} parent=1 // pred_check
      _
    $region35: #{tpu_custom_call.1} parent=1 // pred_check_branch
      %72 = sbr.rel (0) target = $region37
    $region36: #{tpu_custom_call.1} parent=1 // pred_region
      %73 = dma.done [#allocation6], 2048
    $region37: #{tpu_custom_call.1} parent=1 // pred_fallthru
      _
    // Predicated region
    $region38: #{tpu_custom_call.1} parent=1 // pred_check
      _
    $region39: #{tpu_custom_call.1} parent=1 // pred_check_branch
      %75 = sbr.rel (0) target = $region41
    $region40: #{tpu_custom_call.1} parent=1 // pred_region
      %76 = dma.done [#allocation6], 2048
    $region41: #{tpu_custom_call.1} parent=1 // pred_fallthru
      _
    // Predicated region
    $region42: #{tpu_custom_call.1} parent=1 // pred_check
      _
    $region43: #{tpu_custom_call.1} parent=1 // pred_check_branch
      %78 = sbr.rel (0) target = $region45
    $region44: #{tpu_custom_call.1} parent=1 // pred_region
      %79 = dma.done [#allocation9], 2048
    $region45: #{tpu_custom_call.1} parent=1 // pred_fallthru
      _
    %v80 = vld [vmem:[#allocation2] sm:$0xff]
    %v81 = vld [vmem:[#allocation5] sm:$0xff]
    %v82 = vld [vmem:[#allocation5 + $0x8] sm:$0xff]
    %v83 = vld [vmem:[#allocation5 + $0x10] sm:$0xff]
    %v84 = vld [vmem:[#allocation5 + $0x18] sm:$0xff]
    %v85 = vld [vmem:[#allocation5 + $0x20] sm:$0xff]
    %v86 = vld [vmem:[#allocation5 + $0x28] sm:$0xff]
    %v87 = vld [vmem:[#allocation5 + $0x30] sm:$0xff]
    %v88 = vld [vmem:[#allocation5 + $0x38] sm:$0xff]
    %v89 = vld [vmem:[#allocation5 + $0x40] sm:$0xff]
    %v90 = vld [vmem:[#allocation5 + $0x48] sm:$0xff]
    %v91 = vld [vmem:[#allocation5 + $0x50] sm:$0xff]
    %v92 = vld [vmem:[#allocation5 + $0x58] sm:$0xff]
    %v93 = vld [vmem:[#allocation5 + $0x60] sm:$0xff]
    %v94 = vld [vmem:[#allocation5 + $0x68] sm:$0xff]
    %v95 = vld [vmem:[#allocation5 + $0x70] sm:$0xff]
    %v96 = vld [vmem:[#allocation5 + $0x78] sm:$0xff]
    %v97 = vld [vmem:[%s2] sm:$0x1]
    %v99 = vlaneseq
    %v100 = vshrl.u32 %v99, 7
    %v101 = vsub.s32 0, %v100
    %v102 = vrot.slane %v97, %v101
    %104 = vmatprep.subr.mxu0 0.0
    %105 = vmatpush1.msra.mxu0 %v81
    %106 = vmatprep.subr.mxu0 0.0
    %107 = vmatpush1.msra.mxu0 %v82
    %108 = vmatprep.subr.mxu0 0.0
    %109 = vmatpush1.msra.mxu0 %v83
    %110 = vmatprep.subr.mxu0 0.0
    %111 = vmatpush1.msra.mxu0 %v84
    %112 = vmatprep.subr.mxu0 0.0
    %113 = vmatpush1.msra.mxu0 %v85
    %114 = vmatprep.subr.mxu0 0.0
    %115 = vmatpush1.msra.mxu0 %v86
    %116 = vmatprep.subr.mxu0 0.0
    %117 = vmatpush1.msra.mxu0 %v87
    %118 = vmatprep.subr.mxu0 0.0
    %119 = vmatpush1.msra.mxu0 %v88
    %120 = vmatprep.subr.mxu0 0.0
    %121 = vmatpush1.msra.mxu0 %v89
    %122 = vmatprep.subr.mxu0 0.0
    %123 = vmatpush1.msra.mxu0 %v90
    %124 = vmatprep.subr.mxu0 0.0
    %125 = vmatpush1.msra.mxu0 %v91
    %126 = vmatprep.subr.mxu0 0.0
    %127 = vmatpush1.msra.mxu0 %v92
    %128 = vmatprep.subr.mxu0 0.0
    %129 = vmatpush1.msra.mxu0 %v93
    %130 = vmatprep.subr.mxu0 0.0
    %131 = vmatpush1.msra.mxu0 %v94
    %132 = vmatprep.subr.mxu0 0.0
    %133 = vmatpush1.msra.mxu0 %v95
    %134 = vmatprep.subr.mxu0 0.0
    %135 = vmatpush1.msra.mxu0 %v96
    %136 = vmatprep.subr.mxu0 0.0
    %137 = vmatpush1.msra.mxu0 0.0
    %138 = vmatprep.subr.mxu0 0.0
    %139 = vmatpush1.msra.mxu0 0.0
    %140 = vmatprep.subr.mxu0 0.0
    %141 = vmatpush1.msra.mxu0 0.0
    %142 = vmatprep.subr.mxu0 0.0
    %143 = vmatpush1.msra.mxu0 0.0
    %144 = vmatprep.subr.mxu0 0.0
    %145 = vmatpush1.msra.mxu0 0.0
    %146 = vmatprep.subr.mxu0 0.0
    %147 = vmatpush1.msra.mxu0 0.0
    %148 = vmatprep.subr.mxu0 0.0
    %149 = vmatpush1.msra.mxu0 0.0
    %150 = vmatprep.subr.mxu0 0.0
    %151 = vmatpush1.msra.mxu0 0.0
    %152 = vmatprep.subr.mxu0 0.0
    %153 = vmatpush1.msra.mxu0 0.0
    %154 = vmatprep.subr.mxu0 0.0
    %155 = vmatpush1.msra.mxu0 0.0
    %156 = vmatprep.subr.mxu0 0.0
    %157 = vmatpush1.msra.mxu0 0.0
    %158 = vmatprep.subr.mxu0 0.0
    %159 = vmatpush1.msra.mxu0 0.0
    %160 = vmatprep.subr.mxu0 0.0
    %161 = vmatpush1.msra.mxu0 0.0
    %162 = vmatprep.subr.mxu0 0.0
    %163 = vmatpush1.msra.mxu0 0.0
    %164 = vmatprep.subr.mxu0 0.0
    %165 = vmatpush1.msra.mxu0 0.0
    %166 = vmatprep.subr.mxu0 0.0
    %167 = vmatpush1.msra.mxu0 0.0
    %168 = vmatprep.mubr.f32.mxu0 0.0
    %169 = vmatmul.mubr.f32.gmra.mrb[0].mxu0 %v80
    %v170 = vpop.f32.mrb[0].mxu0
    %v171 = vadd.f32 %v102, %v170
    %v172 = vpop.f32.mrb[0].mxu0
    %173 = vdwg.mxu0
    %v174 = vtanh.pop %v171
    %v175 = vld [vmem:[#allocation7] sm:$0xff]
    %v176 = vld [vmem:[#allocation7 + $0x8] sm:$0xff]
    %v177 = vld [vmem:[#allocation7 + $0x10] sm:$0xff]
    %v178 = vld [vmem:[#allocation7 + $0x18] sm:$0xff]
    %v179 = vld [vmem:[#allocation7 + $0x20] sm:$0xff]
    %v180 = vld [vmem:[#allocation7 + $0x28] sm:$0xff]
    %v181 = vld [vmem:[#allocation7 + $0x30] sm:$0xff]
    %v182 = vld [vmem:[#allocation7 + $0x38] sm:$0xff]
    %v183 = vld [vmem:[#allocation7 + $0x40] sm:$0xff]
    %v184 = vld [vmem:[#allocation7 + $0x48] sm:$0xff]
    %v185 = vld [vmem:[#allocation7 + $0x50] sm:$0xff]
    %v186 = vld [vmem:[#allocation7 + $0x58] sm:$0xff]
    %v187 = vld [vmem:[#allocation7 + $0x60] sm:$0xff]
    %v188 = vld [vmem:[#allocation7 + $0x68] sm:$0xff]
    %v189 = vld [vmem:[#allocation7 + $0x70] sm:$0xff]
    %v190 = vld [vmem:[#allocation7 + $0x78] sm:$0xff]
    %v191 = vld [vmem:[%s4] sm:$0x1]
    %v193 = vlaneseq
    %v194 = vshrl.u32 %v193, 7
    %v195 = vsub.s32 0, %v194
    %v196 = vrot.slane %v191, %v195
    %198 = vmatprep.subr.mxu0 0.0
    %199 = vmatpush1.msra.mxu0 %v175
    %200 = vmatprep.subr.mxu0 0.0
    %201 = vmatpush1.msra.mxu0 %v176
    %202 = vmatprep.subr.mxu0 0.0
    %203 = vmatpush1.msra.mxu0 %v177
    %204 = vmatprep.subr.mxu0 0.0
    %205 = vmatpush1.msra.mxu0 %v178
    %206 = vmatprep.subr.mxu0 0.0
    %207 = vmatpush1.msra.mxu0 %v179
    %208 = vmatprep.subr.mxu0 0.0
    %209 = vmatpush1.msra.mxu0 %v180
    %210 = vmatprep.subr.mxu0 0.0
    %211 = vmatpush1.msra.mxu0 %v181
    %212 = vmatprep.subr.mxu0 0.0
    %213 = vmatpush1.msra.mxu0 %v182
    %214 = vmatprep.subr.mxu0 0.0
    %215 = vmatpush1.msra.mxu0 %v183
    %216 = vmatprep.subr.mxu0 0.0
    %217 = vmatpush1.msra.mxu0 %v184
    %218 = vmatprep.subr.mxu0 0.0
    %219 = vmatpush1.msra.mxu0 %v185
    %220 = vmatprep.subr.mxu0 0.0
    %221 = vmatpush1.msra.mxu0 %v186
    %222 = vmatprep.subr.mxu0 0.0
    %223 = vmatpush1.msra.mxu0 %v187
    %224 = vmatprep.subr.mxu0 0.0
    %225 = vmatpush1.msra.mxu0 %v188
    %226 = vmatprep.subr.mxu0 0.0
    %227 = vmatpush1.msra.mxu0 %v189
    %228 = vmatprep.subr.mxu0 0.0
    %229 = vmatpush1.msra.mxu0 %v190
    %230 = vmatprep.subr.mxu0 0.0
    %231 = vmatpush1.msra.mxu0 0.0
    %232 = vmatprep.subr.mxu0 0.0
    %233 = vmatpush1.msra.mxu0 0.0
    %234 = vmatprep.subr.mxu0 0.0
    %235 = vmatpush1.msra.mxu0 0.0
    %236 = vmatprep.subr.mxu0 0.0
    %237 = vmatpush1.msra.mxu0 0.0
    %238 = vmatprep.subr.mxu0 0.0
    %239 = vmatpush1.msra.mxu0 0.0
    %240 = vmatprep.subr.mxu0 0.0
    %241 = vmatpush1.msra.mxu0 0.0
    %242 = vmatprep.subr.mxu0 0.0
    %243 = vmatpush1.msra.mxu0 0.0
    %244 = vmatprep.subr.mxu0 0.0
    %245 = vmatpush1.msra.mxu0 0.0
    %246 = vmatprep.subr.mxu0 0.0
    %247 = vmatpush1.msra.mxu0 0.0
    %248 = vmatprep.subr.mxu0 0.0
    %249 = vmatpush1.msra.mxu0 0.0
    %250 = vmatprep.subr.mxu0 0.0
    %251 = vmatpush1.msra.mxu0 0.0
    %252 = vmatprep.subr.mxu0 0.0
    %253 = vmatpush1.msra.mxu0 0.0
    %254 = vmatprep.subr.mxu0 0.0
    %255 = vmatpush1.msra.mxu0 0.0
    %256 = vmatprep.subr.mxu0 0.0
    %257 = vmatpush1.msra.mxu0 0.0
    %258 = vmatprep.subr.mxu0 0.0
    %259 = vmatpush1.msra.mxu0 0.0
    %260 = vmatprep.subr.mxu0 0.0
    %261 = vmatpush1.msra.mxu0 0.0
    %262 = vmatprep.mubr.f32.mxu0 0.0
    %263 = vmatmul.mubr.f32.gmra.mrb[0].mxu0 %v174
    %v264 = vpop.f32.mrb[0].mxu0
    %v265 = vadd.f32 %v196, %v264
    %v266 = vpop.f32.mrb[0].mxu0
    %267 = vdwg.mxu0
    %v268 = vxor.u32 %v265, 2147483648
    %v269 = vmul.f32 %v268, 1.442695
    %v270 = vpow.pop %v269
    %v271 = vadd.f32 %v270, 1.0
    %v272 = vrcp.pop %v271
    %v273 = vmul.f32 1.0, %v272
    %v274 = vld [vmem:[#allocation8] sm:$0xff]
    %v275 = vld [vmem:[#allocation8 + $0x8] sm:$0xff]
    %v276 = vld [vmem:[#allocation8 + $0x10] sm:$0xff]
    %v277 = vld [vmem:[#allocation8 + $0x18] sm:$0xff]
    %v278 = vld [vmem:[#allocation8 + $0x20] sm:$0xff]
    %v279 = vld [vmem:[#allocation8 + $0x28] sm:$0xff]
    %v280 = vld [vmem:[#allocation8 + $0x30] sm:$0xff]
    %v281 = vld [vmem:[#allocation8 + $0x38] sm:$0xff]
    %v282 = vld [vmem:[#allocation8 + $0x40] sm:$0xff]
    %v283 = vld [vmem:[#allocation8 + $0x48] sm:$0xff]
    %v284 = vld [vmem:[#allocation8 + $0x50] sm:$0xff]
    %v285 = vld [vmem:[#allocation8 + $0x58] sm:$0xff]
    %v286 = vld [vmem:[#allocation8 + $0x60] sm:$0xff]
    %v287 = vld [vmem:[#allocation8 + $0x68] sm:$0xff]
    %v288 = vld [vmem:[#allocation8 + $0x70] sm:$0xff]
    %v289 = vld [vmem:[#allocation8 + $0x78] sm:$0xff]
    %v290 = vld [vmem:[%s6] sm:$0x1]
    %v292 = vlaneseq
    %v293 = vshrl.u32 %v292, 7
    %v294 = vsub.s32 0, %v293
    %v295 = vrot.slane %v290, %v294
    %297 = vmatprep.subr.mxu0 0.0
    %298 = vmatpush1.msra.mxu0 %v274
    %299 = vmatprep.subr.mxu0 0.0
    %300 = vmatpush1.msra.mxu0 %v275
    %301 = vmatprep.subr.mxu0 0.0
    %302 = vmatpush1.msra.mxu0 %v276
    %303 = vmatprep.subr.mxu0 0.0
    %304 = vmatpush1.msra.mxu0 %v277
    %305 = vmatprep.subr.mxu0 0.0
    %306 = vmatpush1.msra.mxu0 %v278
    %307 = vmatprep.subr.mxu0 0.0
    %308 = vmatpush1.msra.mxu0 %v279
    %309 = vmatprep.subr.mxu0 0.0
    %310 = vmatpush1.msra.mxu0 %v280
    %311 = vmatprep.subr.mxu0 0.0
    %312 = vmatpush1.msra.mxu0 %v281
    %313 = vmatprep.subr.mxu0 0.0
    %314 = vmatpush1.msra.mxu0 %v282
    %315 = vmatprep.subr.mxu0 0.0
    %316 = vmatpush1.msra.mxu0 %v283
    %317 = vmatprep.subr.mxu0 0.0
    %318 = vmatpush1.msra.mxu0 %v284
    %319 = vmatprep.subr.mxu0 0.0
    %320 = vmatpush1.msra.mxu0 %v285
    %321 = vmatprep.subr.mxu0 0.0
    %322 = vmatpush1.msra.mxu0 %v286
    %323 = vmatprep.subr.mxu0 0.0
    %324 = vmatpush1.msra.mxu0 %v287
    %325 = vmatprep.subr.mxu0 0.0
    %326 = vmatpush1.msra.mxu0 %v288
    %327 = vmatprep.subr.mxu0 0.0
    %328 = vmatpush1.msra.mxu0 %v289
    %329 = vmatprep.subr.mxu0 0.0
    %330 = vmatpush1.msra.mxu0 0.0
    %331 = vmatprep.subr.mxu0 0.0
    %332 = vmatpush1.msra.mxu0 0.0
    %333 = vmatprep.subr.mxu0 0.0
    %334 = vmatpush1.msra.mxu0 0.0
    %335 = vmatprep.subr.mxu0 0.0
    %336 = vmatpush1.msra.mxu0 0.0
    %337 = vmatprep.subr.mxu0 0.0
    %338 = vmatpush1.msra.mxu0 0.0
    %339 = vmatprep.subr.mxu0 0.0
    %340 = vmatpush1.msra.mxu0 0.0
    %341 = vmatprep.subr.mxu0 0.0
    %342 = vmatpush1.msra.mxu0 0.0
    %343 = vmatprep.subr.mxu0 0.0
    %344 = vmatpush1.msra.mxu0 0.0
    %345 = vmatprep.subr.mxu0 0.0
    %346 = vmatpush1.msra.mxu0 0.0
    %347 = vmatprep.subr.mxu0 0.0
    %348 = vmatpush1.msra.mxu0 0.0
    %349 = vmatprep.subr.mxu0 0.0
    %350 = vmatpush1.msra.mxu0 0.0
    %351 = vmatprep.subr.mxu0 0.0
    %352 = vmatpush1.msra.mxu0 0.0
    %353 = vmatprep.subr.mxu0 0.0
    %354 = vmatpush1.msra.mxu0 0.0
    %355 = vmatprep.subr.mxu0 0.0
    %356 = vmatpush1.msra.mxu0 0.0
    %357 = vmatprep.subr.mxu0 0.0
    %358 = vmatpush1.msra.mxu0 0.0
    %359 = vmatprep.subr.mxu0 0.0
    %360 = vmatpush1.msra.mxu0 0.0
    %361 = vmatprep.mubr.f32.mxu0 0.0
    %362 = vmatmul.mubr.f32.gmra.mrb[0].mxu0 %v273
    %v363 = vpop.f32.mrb[0].mxu0
    %v364 = vadd.f32 %v295, %v363
    %v365 = vpop.f32.mrb[0].mxu0
    %366 = vdwg.mxu0
    %367 = vst [vmem:[#allocation10] sm:$0xff] %v364
    // Predicated region
    $region46: #{tpu_custom_call.1} parent=1 // pred_check
      _
    $region47: #{tpu_custom_call.1} parent=1 // pred_check_branch
      %369 = sbr.rel (0) target = $region49
    $region48: #{tpu_custom_call.1} parent=1 // pred_region
      %s371 = ssub.s32 128, 128
      %372 = vsyncadd [#allocation4], %s371
      %s374 = sshll.u32 [#allocation10], 4
      %s375 = int_to_ptr.vmem [resolvable:$true] %s374
      %377 = dma.vmem_to_hbm [thread:$0]  %s375, 128, %s7, [#allocation4]
    $region49: #{tpu_custom_call.1} parent=1 // pred_fallthru
      _
    // Predicated region
    $region50: #{tpu_custom_call.1} parent=1 // pred_check
      _
    $region51: #{tpu_custom_call.1} parent=1 // pred_check_branch
      %379 = sbr.rel (0) target = $region53
    $region52: #{tpu_custom_call.1} parent=1 // pred_region
      %380 = dma.done [#allocation4], 128
    $region53: #{tpu_custom_call.1} parent=1 // pred_fallthru
      _
    %381 = vsyncpa [#allocation3], 1
    %382 = vsyncpa [#allocation6], 1
    %383 = vsyncpa [#allocation9], 1
    %384 = vsyncpa [#allocation4], 1

</llo_original>
